<compile_context>
chip_gen: v7x
topology: tpu7x:2x2x1
jax: 0.10.0
libtpu: 0.0.40
codegen_flags: <defaults>
</compile_context>

<pallas_src>
import functools

import jax
import jax.numpy as jnp
from jax.experimental import pallas as pl
from jax.experimental.pallas import tpu as pltpu

VECTOR_SIZE = 10   # input_dim
HIDDEN = 50
LATENT = 8
TB_CAP = 4096      # max batch-tile (lanes) per grid step


def _round_up(n, m):
    return (n + m - 1) // m * m


def _vae_kernel(inT_ref,
                w1_ref, b1_ref,
                wh_ref, bh_ref,
                w3_ref, b3_ref,
                w4_ref, b4_ref,
                outT_ref,
                *, in_pad, latent_pad):
    # Input slab: rows [0:in_pad) = x^T (zero-padded), rows [in_pad:) = eps^T.
    xT = inT_ref[:in_pad, :]                                # [in_pad, TB]
    epsT = inT_ref[in_pad:, :]                              # [latent_pad, TB]

    # encode: h1 = relu(W1 @ x + b1)   (W1 zero-padded on the input axis)
    h1 = jnp.dot(w1_ref[...], xT, preferred_element_type=jnp.float32) + b1_ref[...]
    h1 = jnp.maximum(h1, 0.0)                               # [hidden, TB]

    # fused encoder heads: [mu ; logvar] = Wh @ h1 + bh
    head = jnp.dot(wh_ref[...], h1, preferred_element_type=jnp.float32) + bh_ref[...]
    mu = head[:latent_pad, :]                               # [latent_pad, TB]
    logvar = head[latent_pad:, :]                           # [latent_pad, TB]

    # reparameterize: z = mu + eps * exp(0.5 * logvar)
    std = jnp.exp(0.5 * logvar)
    z = mu + epsT * std                                     # [latent_pad, TB]

    # decode
    h3 = jnp.dot(w3_ref[...], z, preferred_element_type=jnp.float32) + b3_ref[...]
    h3 = jnp.maximum(h3, 0.0)                               # [hidden, TB]
    recon = jnp.dot(w4_ref[...], h3, preferred_element_type=jnp.float32) + b4_ref[...]

    # Single lane-dense output slab: rows [0:in_pad) recon, rows [in_pad:) [mu;logvar].
    outT_ref[:in_pad, :] = recon
    outT_ref[in_pad:, :] = head


def _stream_spec(rows, tb):
    # Streamed along the batch (lane) axis, one tile per grid step.
    return pl.BlockSpec((rows, tb), lambda i: (0, i))


def _resident_spec(shape):
    # Constant block index: fetched once, stays VMEM-resident across grid steps.
    return pl.BlockSpec(shape, lambda i: (0, 0))


@functools.partial(jax.jit, static_argnames=("input_dim", "latent_dim"))
def vae_forward(x, eps, params, *, input_dim=VECTOR_SIZE, latent_dim=LATENT):
    """VAE forward. x is any shape reshapeable to (-1, input_dim); eps has B*latent elems."""
    x2d = x.reshape(-1, input_dim).astype(jnp.float32)       # x.view(-1, VECTOR_SIZE)
    B = x2d.shape[0]
    if eps.size != B * latent_dim:
        raise ValueError(f"eps must have {B * latent_dim} elements, got {eps.size}")
    eps2d = eps.reshape(B, latent_dim).astype(jnp.float32)

    (w1, b1, w21, b21, w22, b22, w3, b3, w4, b4) = params
    hidden = w1.shape[0]

    # Sublane-aligned feature padding (keeps every in-kernel slice on an 8-row boundary).
    in_pad = _round_up(input_dim, 8)                         # 16
    latent_pad = _round_up(latent_dim, 8)                    # 8
    in_rows = in_pad + latent_pad                            # 24  (x + eps slab)
    out_rows = in_pad + 2 * latent_pad                       # 32  (recon + mu + logvar slab)

    def pad_to(a, rows, cols):
        return jnp.pad(a, ((0, rows - a.shape[0]), (0, cols - a.shape[1])))

    # Zero-padded weights (PyTorch [out, in] layout kept) + fused encoder head.
    w1p = pad_to(w1, hidden, in_pad)                         # [hidden, in_pad]
    whp = jnp.concatenate([pad_to(w21, latent_pad, hidden),
                           pad_to(w22, latent_pad, hidden)], axis=0)   # [2*latent_pad, hidden]
    bhp = jnp.concatenate([pad_to(b21, latent_pad, 1),
                           pad_to(b22, latent_pad, 1)], axis=0)        # [2*latent_pad, 1]
    w3p = pad_to(w3, hidden, latent_pad)                     # [hidden, latent_pad]
    w4p = pad_to(w4, in_pad, hidden)                         # [in_pad, hidden]
    b4p = pad_to(b4, in_pad, 1)                              # [in_pad, 1]

    # Batch tiling: multiples of 256 (full MXU passes), large cap, and >= 2 grid
    # steps whenever the batch allows it (so both v7x TensorCores get work).
    b256 = _round_up(B, 256)
    if b256 <= 256:
        tb = b256
    else:
        tb = min(TB_CAP, _round_up((b256 + 1) // 2, 256))
    b_pad = _round_up(B, tb)
    pad = b_pad - B

    # Single batch-on-lanes input slab: [x_padded | eps_padded]^T.
    in_bm = jnp.concatenate(
        [jnp.pad(x2d, ((0, pad), (0, in_pad - input_dim))),
         jnp.pad(eps2d, ((0, pad), (0, latent_pad - latent_dim)))], axis=1)
    inT = in_bm.T                                            # [in_rows, b_pad]

    weights = (w1p, b1, whp, bhp, w3p, b3, w4p, b4p)
    in_specs = [_stream_spec(in_rows, tb)] + [_resident_spec(w.shape) for w in weights]

    flops = 2 * b_pad * hidden * (in_pad + 2 * latent_pad + latent_pad + in_pad)
    cost = pl.CostEstimate(
        flops=int(flops),
        transcendentals=int(latent_pad * b_pad),
        bytes_accessed=int(4 * b_pad * (in_rows + out_rows)))

    outT = pl.pallas_call(
        functools.partial(_vae_kernel, in_pad=in_pad, latent_pad=latent_pad),
        grid=(b_pad // tb,),
        out_shape=jax.ShapeDtypeStruct((out_rows, b_pad), jnp.float32),
        in_specs=in_specs,
        out_specs=_stream_spec(out_rows, tb),
        compiler_params=pltpu.CompilerParams(
            dimension_semantics=("parallel",),          # megacore sharding on v7x
            vmem_limit_bytes=32 * 1024 * 1024),
        cost_estimate=cost,
    )(inT, *weights)

    # Back to batch-major once, drop padded columns/rows, split the slab.
    out = outT[:, :B].T                                      # [B, out_rows]
    recon = out[:, :input_dim]
    mu = out[:, in_pad:in_pad + latent_dim]
    logvar = out[:, in_pad + latent_pad:in_pad + latent_pad + latent_dim]
    return recon, mu, logvar


def init_params(key, input_dim=VECTOR_SIZE, hidden=HIDDEN, latent_dim=LATENT):
    """Deterministic init mimicking nn.Linear's U(-1/sqrt(fan_in), 1/sqrt(fan_in)).
    Weights kept in PyTorch [out, in] layout; biases as [out, 1] columns."""
    def linear(k, fan_in, fan_out):
        kw, kb = jax.random.split(k)
        bound = 1.0 / jnp.sqrt(fan_in)
        w = jax.random.uniform(kw, (fan_out, fan_in), jnp.float32, -bound, bound)
        b = jax.random.uniform(kb, (fan_out, 1), jnp.float32, -bound, bound)
        return w, b

    k1, k21, k22, k3, k4 = jax.random.split(key, 5)
    w1, b1 = linear(k1, input_dim, hidden)        # fc1
    w21, b21 = linear(k21, hidden, latent_dim)    # fc21
    w22, b22 = linear(k22, hidden, latent_dim)    # fc22
    w3, b3 = linear(k3, latent_dim, hidden)       # fc3
    w4, b4 = linear(k4, hidden, input_dim)        # fc4
    return (w1, b1, w21, b21, w22, b22, w3, b3, w4, b4)


def _reference(x, eps, params, input_dim=VECTOR_SIZE, latent_dim=LATENT):
    (w1, b1, w21, b21, w22, b22, w3, b3, w4, b4) = params
    x2d = x.reshape(-1, input_dim)
    eps2d = eps.reshape(-1, latent_dim)
    h1 = jnp.maximum(x2d @ w1.T + b1.T, 0.0)
    mu = h1 @ w21.T + b21.T
    logvar = h1 @ w22.T + b22.T
    z = mu + eps2d * jnp.exp(0.5 * logvar)
    h3 = jnp.maximum(z @ w3.T + b3.T, 0.0)
    return h3 @ w4.T + b4.T, mu, logvar


if __name__ == "__main__":
    key = jax.random.PRNGKey(0)
    k_x, k_eps, k_p, k_x2, k_e2 = jax.random.split(key, 5)

    params = init_params(k_p)

    # Small input consistent with the module: any (..., 10) gets viewed as (-1, 10).
    x = jax.random.normal(k_x, (2, 4, VECTOR_SIZE), dtype=jnp.float32)
    B = 2 * 4
    eps = jax.random.normal(k_eps, (B, LATENT), dtype=jnp.float32)  # torch.randn_like(std)

    recon, mu, logvar = vae_forward(x, eps, params)
    jax.block_until_ready((recon, mu, logvar))

    r_ref, mu_ref, lv_ref = _reference(x, eps, params)
    assert recon.shape == (B, VECTOR_SIZE)
    assert mu.shape == (B, LATENT) and logvar.shape == (B, LATENT)
    assert jnp.allclose(recon, r_ref, atol=1e-5)
    assert jnp.allclose(mu, mu_ref, atol=1e-5)
    assert jnp.allclose(logvar, lv_ref, atol=1e-5)

    # Exercise the multi-step grid + tail-padding path (B=600 -> TB=512, grid=(2,)).
    B2 = 600
    x2 = jax.random.normal(k_x2, (B2, VECTOR_SIZE), dtype=jnp.float32)
    eps2 = jax.random.normal(k_e2, (B2, LATENT), dtype=jnp.float32)
    recon2, mu2, lv2 = vae_forward(x2, eps2, params)
    jax.block_until_ready((recon2, mu2, lv2))
    r2_ref, mu2_ref, lv2_ref = _reference(x2, eps2, params)
    assert jnp.allclose(recon2, r2_ref, atol=1e-4)
    assert jnp.allclose(mu2, mu2_ref, atol=1e-4)
    assert jnp.allclose(lv2, lv2_ref, atol=1e-4)

    print("KERNEL_OK")
</pallas_src>

<mosaic_0001>
module attributes {stable_mosaic.version = 11 : i64} {
  func.func @_vae_kernel(%arg0: i32, %arg1: memref<24x256xf32, #tpu.memory_space<vmem>>, %arg2: memref<50x16xf32, #tpu.memory_space<vmem>>, %arg3: memref<50x1xf32, #tpu.memory_space<vmem>>, %arg4: memref<16x50xf32, #tpu.memory_space<vmem>>, %arg5: memref<16x1xf32, #tpu.memory_space<vmem>>, %arg6: memref<50x8xf32, #tpu.memory_space<vmem>>, %arg7: memref<50x1xf32, #tpu.memory_space<vmem>>, %arg8: memref<16x50xf32, #tpu.memory_space<vmem>>, %arg9: memref<16x1xf32, #tpu.memory_space<vmem>>, %arg10: memref<32x256xf32, #tpu.memory_space<vmem>>) attributes {dimension_semantics = [#tpu.dimension_semantics<parallel>], iteration_bounds = array<i64: 1>, scalar_prefetch = 0 : i64, scratch_operands = 0 : i64, tpu.core_type = #tpu.core_type<tc>, window_params = [{transform_indices = @transform_0, window_bounds = array<i64: 24, 256>}, {pipeline_mode = #tpu.pipeline_mode<synchronous>, transform_indices = @transform_1, window_bounds = array<i64: 50, 16>}, {pipeline_mode = #tpu.pipeline_mode<synchronous>, transform_indices = @transform_2, window_bounds = array<i64: 50, 1>}, {pipeline_mode = #tpu.pipeline_mode<synchronous>, transform_indices = @transform_3, window_bounds = array<i64: 16, 50>}, {pipeline_mode = #tpu.pipeline_mode<synchronous>, transform_indices = @transform_4, window_bounds = array<i64: 16, 1>}, {pipeline_mode = #tpu.pipeline_mode<synchronous>, transform_indices = @transform_5, window_bounds = array<i64: 50, 8>}, {pipeline_mode = #tpu.pipeline_mode<synchronous>, transform_indices = @transform_6, window_bounds = array<i64: 50, 1>}, {pipeline_mode = #tpu.pipeline_mode<synchronous>, transform_indices = @transform_7, window_bounds = array<i64: 16, 50>}, {pipeline_mode = #tpu.pipeline_mode<synchronous>, transform_indices = @transform_8, window_bounds = array<i64: 16, 1>}, {transform_indices = @transform_9, window_bounds = array<i64: 32, 256>}]} {
    %c0 = arith.constant 0 : index
    %c0_0 = arith.constant 0 : index
    %0 = vector.load %arg1[%c0, %c0_0] : memref<24x256xf32, #tpu.memory_space<vmem>>, vector<16x256xf32>
    %c16 = arith.constant 16 : index
    %c0_1 = arith.constant 0 : index
    %1 = vector.load %arg1[%c16, %c0_1] : memref<24x256xf32, #tpu.memory_space<vmem>>, vector<8x256xf32>
    %c0_2 = arith.constant 0 : index
    %c0_3 = arith.constant 0 : index
    %2 = vector.load %arg2[%c0_2, %c0_3] : memref<50x16xf32, #tpu.memory_space<vmem>>, vector<50x16xf32>
    %cst = arith.constant dense<0.000000e+00> : vector<50x256xf32>
    %3 = tpu.matmul %2, %0, %cst {dimension_numbers = #tpu.dot_dimension_numbers<[1], [0], [0], [1], [0, 0, 1, 1], [], []>} : vector<50x16xf32>, vector<16x256xf32>, vector<50x256xf32> -> vector<50x256xf32>
    %c0_4 = arith.constant 0 : index
    %c0_5 = arith.constant 0 : index
    %4 = vector.load %arg3[%c0_4, %c0_5] : memref<50x1xf32, #tpu.memory_space<vmem>>, vector<50x1xf32>
    %5 = vector.broadcast %4 : vector<50x1xf32> to vector<50x256xf32>
    %6 = arith.addf %3, %5 : vector<50x256xf32>
    %cst_6 = arith.constant 0.000000e+00 : f32
    %7 = vector.broadcast %cst_6 : f32 to vector<50x256xf32>
    %8 = arith.maximumf %6, %7 : vector<50x256xf32>
    %c0_7 = arith.constant 0 : index
    %c0_8 = arith.constant 0 : index
    %9 = vector.load %arg4[%c0_7, %c0_8] : memref<16x50xf32, #tpu.memory_space<vmem>>, vector<16x50xf32>
    %cst_9 = arith.constant dense<0.000000e+00> : vector<16x256xf32>
    %10 = tpu.matmul %9, %8, %cst_9 {dimension_numbers = #tpu.dot_dimension_numbers<[1], [0], [0], [1], [0, 0, 1, 1], [], []>} : vector<16x50xf32>, vector<50x256xf32>, vector<16x256xf32> -> vector<16x256xf32>
    %c0_10 = arith.constant 0 : index
    %c0_11 = arith.constant 0 : index
    %11 = vector.load %arg5[%c0_10, %c0_11] : memref<16x1xf32, #tpu.memory_space<vmem>>, vector<16x1xf32>
    %12 = vector.broadcast %11 : vector<16x1xf32> to vector<16x256xf32>
    %13 = arith.addf %10, %12 : vector<16x256xf32>
    %14 = vector.extract_strided_slice %13 {offsets = [0, 0], sizes = [8, 256], strides = [1, 1]} : vector<16x256xf32> to vector<8x256xf32>
    %15 = vector.extract_strided_slice %13 {offsets = [8, 0], sizes = [8, 256], strides = [1, 1]} : vector<16x256xf32> to vector<8x256xf32>
    %cst_12 = arith.constant 5.000000e-01 : f32
    %16 = vector.broadcast %cst_12 : f32 to vector<8x256xf32>
    %17 = arith.mulf %16, %15 : vector<8x256xf32>
    %18 = math.exp %17 : vector<8x256xf32>
    %19 = arith.mulf %1, %18 : vector<8x256xf32>
    %20 = arith.addf %14, %19 : vector<8x256xf32>
    %c0_13 = arith.constant 0 : index
    %c0_14 = arith.constant 0 : index
    %21 = vector.load %arg6[%c0_13, %c0_14] : memref<50x8xf32, #tpu.memory_space<vmem>>, vector<50x8xf32>
    %cst_15 = arith.constant dense<0.000000e+00> : vector<50x256xf32>
    %22 = tpu.matmul %21, %20, %cst_15 {dimension_numbers = #tpu.dot_dimension_numbers<[1], [0], [0], [1], [0, 0, 1, 1], [], []>} : vector<50x8xf32>, vector<8x256xf32>, vector<50x256xf32> -> vector<50x256xf32>
    %c0_16 = arith.constant 0 : index
    %c0_17 = arith.constant 0 : index
    %23 = vector.load %arg7[%c0_16, %c0_17] : memref<50x1xf32, #tpu.memory_space<vmem>>, vector<50x1xf32>
    %24 = vector.broadcast %23 : vector<50x1xf32> to vector<50x256xf32>
    %25 = arith.addf %22, %24 : vector<50x256xf32>
    %cst_18 = arith.constant 0.000000e+00 : f32
    %26 = vector.broadcast %cst_18 : f32 to vector<50x256xf32>
    %27 = arith.maximumf %25, %26 : vector<50x256xf32>
    %c0_19 = arith.constant 0 : index
    %c0_20 = arith.constant 0 : index
    %28 = vector.load %arg8[%c0_19, %c0_20] : memref<16x50xf32, #tpu.memory_space<vmem>>, vector<16x50xf32>
    %cst_21 = arith.constant dense<0.000000e+00> : vector<16x256xf32>
    %29 = tpu.matmul %28, %27, %cst_21 {dimension_numbers = #tpu.dot_dimension_numbers<[1], [0], [0], [1], [0, 0, 1, 1], [], []>} : vector<16x50xf32>, vector<50x256xf32>, vector<16x256xf32> -> vector<16x256xf32>
    %c0_22 = arith.constant 0 : index
    %c0_23 = arith.constant 0 : index
    %30 = vector.load %arg9[%c0_22, %c0_23] : memref<16x1xf32, #tpu.memory_space<vmem>>, vector<16x1xf32>
    %31 = vector.broadcast %30 : vector<16x1xf32> to vector<16x256xf32>
    %32 = arith.addf %29, %31 : vector<16x256xf32>
    %c0_24 = arith.constant 0 : index
    %c0_25 = arith.constant 0 : index
    %33 = vector.load %arg10[%c0_24, %c0_25] : memref<32x256xf32, #tpu.memory_space<vmem>>, vector<16x256xf32>
    tpu.vector_store %arg10[%c0_24, %c0_25], %32 {strides = array<i32>} : memref<32x256xf32, #tpu.memory_space<vmem>>, vector<16x256xf32>,
    %c16_26 = arith.constant 16 : index
    %c0_27 = arith.constant 0 : index
    %34 = vector.load %arg10[%c16_26, %c0_27] : memref<32x256xf32, #tpu.memory_space<vmem>>, vector<16x256xf32>
    tpu.vector_store %arg10[%c16_26, %c0_27], %13 {strides = array<i32>} : memref<32x256xf32, #tpu.memory_space<vmem>>, vector<16x256xf32>,
    return
  }
  func.func @transform_0(%arg0: i32) -> (i32, i32) {
    %c0_i32 = arith.constant 0 : i32
    %c0_i32_0 = arith.constant 0 : i32
    return %c0_i32, %arg0 : i32, i32
  }
  func.func @transform_1(%arg0: i32) -> (i32, i32) {
    %c0_i32 = arith.constant 0 : i32
    %c0_i32_0 = arith.constant 0 : i32
    %c0_i32_1 = arith.constant 0 : i32
    return %c0_i32, %c0_i32_0 : i32, i32
  }
  func.func @transform_2(%arg0: i32) -> (i32, i32) {
    %c0_i32 = arith.constant 0 : i32
    %c0_i32_0 = arith.constant 0 : i32
    %c0_i32_1 = arith.constant 0 : i32
    return %c0_i32, %c0_i32_0 : i32, i32
  }
  func.func @transform_3(%arg0: i32) -> (i32, i32) {
    %c0_i32 = arith.constant 0 : i32
    %c0_i32_0 = arith.constant 0 : i32
    %c0_i32_1 = arith.constant 0 : i32
    return %c0_i32, %c0_i32_0 : i32, i32
  }
  func.func @transform_4(%arg0: i32) -> (i32, i32) {
    %c0_i32 = arith.constant 0 : i32
    %c0_i32_0 = arith.constant 0 : i32
    %c0_i32_1 = arith.constant 0 : i32
    return %c0_i32, %c0_i32_0 : i32, i32
  }
  func.func @transform_5(%arg0: i32) -> (i32, i32) {
    %c0_i32 = arith.constant 0 : i32
    %c0_i32_0 = arith.constant 0 : i32
    %c0_i32_1 = arith.constant 0 : i32
    return %c0_i32, %c0_i32_0 : i32, i32
  }
  func.func @transform_6(%arg0: i32) -> (i32, i32) {
    %c0_i32 = arith.constant 0 : i32
    %c0_i32_0 = arith.constant 0 : i32
    %c0_i32_1 = arith.constant 0 : i32
    return %c0_i32, %c0_i32_0 : i32, i32
  }
  func.func @transform_7(%arg0: i32) -> (i32, i32) {
    %c0_i32 = arith.constant 0 : i32
    %c0_i32_0 = arith.constant 0 : i32
    %c0_i32_1 = arith.constant 0 : i32
    return %c0_i32, %c0_i32_0 : i32, i32
  }
  func.func @transform_8(%arg0: i32) -> (i32, i32) {
    %c0_i32 = arith.constant 0 : i32
    %c0_i32_0 = arith.constant 0 : i32
    %c0_i32_1 = arith.constant 0 : i32
    return %c0_i32, %c0_i32_0 : i32, i32
  }
  func.func @transform_9(%arg0: i32) -> (i32, i32) {
    %c0_i32 = arith.constant 0 : i32
    %c0_i32_0 = arith.constant 0 : i32
    return %c0_i32, %arg0 : i32, i32
  }
}

</mosaic_0001>

<llo_original>
// kernel: vae_forward.1
$region0: #{vae_forward.1}
  #allocation0 [shape = 'u32[]', space=smem, size = 0x4, offset = 0x4, fixed_abs, tag = 'smem constant byte address 0x4 - core index']
  #allocation1 [shape = 'u32[144,128]{1,0:T(1,128)}', space=vmem, size = 0x12000, scoped, tag = 'internal scratch']
  %s0 = inlined_call_operand.vmem [shape: f32[24,256], index: 0, kind: input, shape index: {}]
  %s1 = inlined_call_operand.vmem [shape: f32[50,16], index: 1, kind: input, shape index: {}]
  %s2 = inlined_call_operand.vmem [shape: f32[50,1], index: 2, kind: input, shape index: {}]
  %s3 = inlined_call_operand.vmem [shape: f32[16,50], index: 3, kind: input, shape index: {}]
  %s4 = inlined_call_operand.vmem [shape: f32[16,1], index: 4, kind: input, shape index: {}]
  %s5 = inlined_call_operand.vmem [shape: f32[50,8], index: 5, kind: input, shape index: {}]
  %s6 = inlined_call_operand.vmem [shape: f32[50,1], index: 6, kind: input, shape index: {}]
  %s7 = inlined_call_operand.vmem [shape: f32[16,50], index: 7, kind: input, shape index: {}]
  %s8 = inlined_call_operand.vmem [shape: f32[16,1], index: 8, kind: input, shape index: {}]
  %s9 = inlined_call_operand.vmem [shape: f32[32,256], index: 9, kind: output, shape index: {}]
  %s10 = sld [smem:[#allocation0]]
  $region46: #{vae_forward.1} parent=0
    _
  %s12 = ssub.s32 1, %s10
  %s13 = scalar_select 0, %s12, %s10
  // Predicated region
  $region2: #{vae_forward.1} parent=0 // pred_check
    _
  $region3: #{vae_forward.1} parent=0 // pred_check_branch
    %15 = sbr.rel (0) target = $region5
  $region4: #{vae_forward.1} parent=0 // pred_region
    _
  $region5: #{vae_forward.1} parent=0 // pred_fallthru
    _
  // Predicated region
  $region6: #{vae_forward.1} parent=0 // pred_check
    _
  $region7: #{vae_forward.1} parent=0 // pred_check_branch
    %17 = sbr.rel (0) target = $region9
  $region8: #{vae_forward.1} parent=0 // pred_region
    _
  $region9: #{vae_forward.1} parent=0 // pred_fallthru
    _
  // Predicated region
  $region10: #{vae_forward.1} parent=0 // pred_check
    _
  $region11: #{vae_forward.1} parent=0 // pred_check_branch
    %19 = sbr.rel (0) target = $region13
  $region12: #{vae_forward.1} parent=0 // pred_region
    _
  $region13: #{vae_forward.1} parent=0 // pred_fallthru
    _
  // Predicated region
  $region14: #{vae_forward.1} parent=0 // pred_check
    _
  $region15: #{vae_forward.1} parent=0 // pred_check_branch
    %21 = sbr.rel (0) target = $region17
  $region16: #{vae_forward.1} parent=0 // pred_region
    _
  $region17: #{vae_forward.1} parent=0 // pred_fallthru
    _
  // Predicated region
  $region18: #{vae_forward.1} parent=0 // pred_check
    _
  $region19: #{vae_forward.1} parent=0 // pred_check_branch
    %23 = sbr.rel (0) target = $region21
  $region20: #{vae_forward.1} parent=0 // pred_region
    _
  $region21: #{vae_forward.1} parent=0 // pred_fallthru
    _
  // Predicated region
  $region22: #{vae_forward.1} parent=0 // pred_check
    _
  $region23: #{vae_forward.1} parent=0 // pred_check_branch
    %25 = sbr.rel (0) target = $region25
  $region24: #{vae_forward.1} parent=0 // pred_region
    _
  $region25: #{vae_forward.1} parent=0 // pred_fallthru
    _
  // Predicated region
  $region26: #{vae_forward.1} parent=0 // pred_check
    _
  $region27: #{vae_forward.1} parent=0 // pred_check_branch
    %27 = sbr.rel (0) target = $region29
  $region28: #{vae_forward.1} parent=0 // pred_region
    _
  $region29: #{vae_forward.1} parent=0 // pred_fallthru
    _
  // Predicated region
  $region30: #{vae_forward.1} parent=0 // pred_check
    _
  $region31: #{vae_forward.1} parent=0 // pred_check_branch
    %29 = sbr.rel (0) target = $region33
  $region32: #{vae_forward.1} parent=0 // pred_region
    _
  $region33: #{vae_forward.1} parent=0 // pred_fallthru
    _
  // Predicated region
  $region34: #{vae_forward.1} parent=0 // pred_check
    _
  $region35: #{vae_forward.1} parent=0 // pred_check_branch
    %31 = sbr.rel (0) target = $region37
  $region36: #{vae_forward.1} parent=0 // pred_region
    _
  $region37: #{vae_forward.1} parent=0 // pred_fallthru
    _
  %v32 = vld [vmem:[%s0] sm:$0xff]
  %v33 = vld [vmem:[%s0 + $0x8] sm:$0xff]
  %v34 = vld [vmem:[%s0 + $0x10] sm:$0xff]
  %v35 = vld [vmem:[%s0 + $0x18] sm:$0xff]
  %v36 = vld [vmem:[%s0 + $0x20] sm:$0xff]
  %v37 = vld [vmem:[%s0 + $0x28] sm:$0xff]
  %v38 = vld [vmem:[%s1] sm:$0xff]
  %v39 = vld [vmem:[%s1 + $0x8] sm:$0xff]
  %v40 = vld [vmem:[%s1 + $0x10] sm:$0xff]
  %v41 = vld [vmem:[%s1 + $0x18] sm:$0xff]
  %v42 = vld [vmem:[%s1 + $0x20] sm:$0xff]
  %v43 = vld [vmem:[%s1 + $0x28] sm:$0xff]
  %v44 = vld [vmem:[%s1 + $0x30] sm:$0x3]
  %v45 = vld [vmem:[%s2] sm:$0xff]
  %v46 = vld [vmem:[%s2 + $0x8] sm:$0xff]
  %v47 = vld [vmem:[%s2 + $0x10] sm:$0xff]
  %v48 = vld [vmem:[%s2 + $0x18] sm:$0xff]
  %v49 = vld [vmem:[%s2 + $0x20] sm:$0xff]
  %v50 = vld [vmem:[%s2 + $0x28] sm:$0xff]
  %v51 = vld [vmem:[%s2 + $0x30] sm:$0x3]
  %53 = vset.pattern.permute.xlu0 0
  %54 = vperm.xlu0 %53, %v45
  %v55 = vpop.permute.xlu0 %54
  %58 = vset.pattern.permute.xlu0 0
  %59 = vperm.xlu0 %58, %v46
  %v60 = vpop.permute.xlu0 %59
  %63 = vset.pattern.permute.xlu0 0
  %64 = vperm.xlu0 %63, %v47
  %v65 = vpop.permute.xlu0 %64
  %68 = vset.pattern.permute.xlu0 0
  %69 = vperm.xlu0 %68, %v48
  %v70 = vpop.permute.xlu0 %69
  %73 = vset.pattern.permute.xlu0 0
  %74 = vperm.xlu0 %73, %v49
  %v75 = vpop.permute.xlu0 %74
  %78 = vset.pattern.permute.xlu0 0
  %79 = vperm.xlu0 %78, %v50
  %v80 = vpop.permute.xlu0 %79
  %83 = vset.pattern.permute.xlu0 0
  %84 = vperm.xlu0 %83, %v51
  %v85 = vpop.permute.xlu0 %84
  %vm87 = vcmask 130048
  %v89 = vsel %vm87, %v38, 0
  %v92 = vsel %vm87, %v39, 0
  %v95 = vsel %vm87, %v40, 0
  %v98 = vsel %vm87, %v41, 0
  %v101 = vsel %vm87, %v42, 0
  %v104 = vsel %vm87, %v43, 0
  %v107 = vsel %vm87, %v44, 0
  %109 = vmatprep.subr.mxu0 %v33
  %110 = vmatpush1.msra.mxu0 %v32
  %111 = vmatprep.subr.mxu0 %v35
  %112 = vmatpush1.msra.mxu0 %v34
  %113 = vmatprep.subr.mxu0 0.0
  %114 = vmatpush1.msra.mxu0 0.0
  %115 = vmatprep.subr.mxu0 0.0
  %116 = vmatpush1.msra.mxu0 0.0
  %117 = vmatprep.subr.mxu0 0.0
  %118 = vmatpush1.msra.mxu0 0.0
  %119 = vmatprep.subr.mxu0 0.0
  %120 = vmatpush1.msra.mxu0 0.0
  %121 = vmatprep.subr.mxu0 0.0
  %122 = vmatpush1.msra.mxu0 0.0
  %123 = vmatprep.subr.mxu0 0.0
  %124 = vmatpush1.msra.mxu0 0.0
  %125 = vmatprep.subr.mxu0 0.0
  %126 = vmatpush1.msra.mxu0 0.0
  %127 = vmatprep.subr.mxu0 0.0
  %128 = vmatpush1.msra.mxu0 0.0
  %129 = vmatprep.subr.mxu0 0.0
  %130 = vmatpush1.msra.mxu0 0.0
  %131 = vmatprep.subr.mxu0 0.0
  %132 = vmatpush1.msra.mxu0 0.0
  %133 = vmatprep.subr.mxu0 0.0
  %134 = vmatpush1.msra.mxu0 0.0
  %135 = vmatprep.subr.mxu0 0.0
  %136 = vmatpush1.msra.mxu0 0.0
  %137 = vmatprep.subr.mxu0 0.0
  %138 = vmatpush1.msra.mxu0 0.0
  %139 = vmatprep.subr.mxu0 0.0
  %140 = vmatpush1.msra.mxu0 0.0
  %141 = vmatprep.subr.mxu0 0.0
  %142 = vmatpush1.msra.mxu0 0.0
  %143 = vmatprep.subr.mxu0 0.0
  %144 = vmatpush1.msra.mxu0 0.0
  %145 = vmatprep.subr.mxu0 0.0
  %146 = vmatpush1.msra.mxu0 0.0
  %147 = vmatprep.subr.mxu0 0.0
  %148 = vmatpush1.msra.mxu0 0.0
  %149 = vmatprep.subr.mxu0 0.0
  %150 = vmatpush1.msra.mxu0 0.0
  %151 = vmatprep.subr.mxu0 0.0
  %152 = vmatpush1.msra.mxu0 0.0
  %153 = vmatprep.subr.mxu0 0.0
  %154 = vmatpush1.msra.mxu0 0.0
  %155 = vmatprep.subr.mxu0 0.0
  %156 = vmatpush1.msra.mxu0 0.0
  %157 = vmatprep.subr.mxu0 0.0
  %158 = vmatpush1.msra.mxu0 0.0
  %159 = vmatprep.subr.mxu0 0.0
  %160 = vmatpush1.msra.mxu0 0.0
  %161 = vmatprep.subr.mxu0 0.0
  %162 = vmatpush1.msra.mxu0 0.0
  %163 = vmatprep.subr.mxu0 0.0
  %164 = vmatpush1.msra.mxu0 0.0
  %165 = vmatprep.subr.mxu0 0.0
  %166 = vmatpush1.msra.mxu0 0.0
  %167 = vmatprep.subr.mxu0 0.0
  %168 = vmatpush1.msra.mxu0 0.0
  %169 = vmatprep.subr.mxu0 0.0
  %170 = vmatpush1.msra.mxu0 0.0
  %171 = vmatprep.subr.mxu0 0.0
  %172 = vmatpush1.msra.mxu0 0.0
  %173 = vmatprep.mubr.f32.mxu0 0.0
  %174 = vmatmul.mubr.f32.gmra.mrb[0].mxu0 %v89
  %v175 = vpop.f32.mrb[0].mxu0
  %v176 = vadd.f32 %v55, %v175
  %v177 = vpop.f32.mrb[0].mxu0
  %v178 = vadd.f32 %v55, %v177
  %179 = vmatprep.mubr.f32.mxu0 0.0
  %180 = vmatmul.mubr.f32.gmra.mrb[0].mxu0 %v92
  %v181 = vpop.f32.mrb[0].mxu0
  %v182 = vadd.f32 %v60, %v181
  %v183 = vpop.f32.mrb[0].mxu0
  %v184 = vadd.f32 %v60, %v183
  %185 = vmatprep.mubr.f32.mxu0 0.0
  %186 = vmatmul.mubr.f32.gmra.mrb[0].mxu0 %v95
  %v187 = vpop.f32.mrb[0].mxu0
  %v188 = vadd.f32 %v65, %v187
  %v189 = vpop.f32.mrb[0].mxu0
  %v190 = vadd.f32 %v65, %v189
  %191 = vmatprep.mubr.f32.mxu0 0.0
  %192 = vmatmul.mubr.f32.gmra.mrb[0].mxu0 %v98
  %v193 = vpop.f32.mrb[0].mxu0
  %v194 = vadd.f32 %v70, %v193
  %v195 = vpop.f32.mrb[0].mxu0
  %v196 = vadd.f32 %v70, %v195
  %197 = vmatprep.mubr.f32.mxu0 0.0
  %198 = vmatmul.mubr.f32.gmra.mrb[0].mxu0 %v101
  %v199 = vpop.f32.mrb[0].mxu0
  %v200 = vadd.f32 %v75, %v199
  %v201 = vpop.f32.mrb[0].mxu0
  %v202 = vadd.f32 %v75, %v201
  %203 = vmatprep.mubr.f32.mxu0 0.0
  %204 = vmatmul.mubr.f32.gmra.mrb[0].mxu0 %v104
  %v205 = vpop.f32.mrb[0].mxu0
  %v206 = vadd.f32 %v80, %v205
  %v207 = vpop.f32.mrb[0].mxu0
  %v208 = vadd.f32 %v80, %v207
  %209 = vmatprep.mubr.f32.mxu0 0.0
  %210 = vmatmul.mubr.f32.gmra.mrb[0].mxu0 %v107
  %v211 = vpop.f32.mrb[0].mxu0
  %v212 = vadd.f32 %v85, %v211
  %v213 = vpop.f32.mrb[0].mxu0
  %v214 = vadd.f32 %v85, %v213
  %215 = vdwg.mxu0
  %v216 = vmax.f32 %v176, 0.0
  %v217 = vmax.f32 %v178, 0.0
  %v218 = vmax.f32 %v182, 0.0
  %v219 = vmax.f32 %v184, 0.0
  %v220 = vmax.f32 %v188, 0.0
  %v221 = vmax.f32 %v190, 0.0
  %v222 = vmax.f32 %v194, 0.0
  %v223 = vmax.f32 %v196, 0.0
  %v224 = vmax.f32 %v200, 0.0
  %v225 = vmax.f32 %v202, 0.0
  %v226 = vmax.f32 %v206, 0.0
  %v227 = vmax.f32 %v208, 0.0
  %v228 = vmax.f32 %v212, 0.0
  %v229 = vmax.f32 %v214, 0.0
  %v230 = vld [vmem:[%s3] sm:$0xff]
  %v231 = vld [vmem:[%s3 + $0x8] sm:$0xff]
  %v232 = vld [vmem:[%s4] sm:$0xff]
  %v233 = vld [vmem:[%s4 + $0x8] sm:$0xff]
  %235 = vset.pattern.permute.xlu0 0
  %236 = vperm.xlu0 %235, %v232
  %v237 = vpop.permute.xlu0 %236
  %240 = vset.pattern.permute.xlu0 0
  %241 = vperm.xlu0 %240, %v233
  %v242 = vpop.permute.xlu0 %241
  %vm244 = vcmask 408576
  %v246 = vsel %vm244, %v230, 0
  %v249 = vsel %vm244, %v231, 0
  %vm251 = vcmask 1041408
  %v253 = vsel %vm251, %v228, 0
  %v256 = vsel %vm251, %v229, 0
  %258 = vmatprep.subr.mxu0 %v217
  %259 = vmatpush1.msra.mxu0 %v216
  %260 = vmatprep.subr.mxu0 %v219
  %261 = vmatpush1.msra.mxu0 %v218
  %262 = vmatprep.subr.mxu0 %v221
  %263 = vmatpush1.msra.mxu0 %v220
  %264 = vmatprep.subr.mxu0 %v223
  %265 = vmatpush1.msra.mxu0 %v222
  %266 = vmatprep.subr.mxu0 %v225
  %267 = vmatpush1.msra.mxu0 %v224
  %268 = vmatprep.subr.mxu0 %v227
  %269 = vmatpush1.msra.mxu0 %v226
  %270 = vmatprep.subr.mxu0 %v256
  %271 = vmatpush1.msra.mxu0 %v253
  %272 = vmatprep.subr.mxu0 0.0
  %273 = vmatpush1.msra.mxu0 0.0
  %274 = vmatprep.subr.mxu0 0.0
  %275 = vmatpush1.msra.mxu0 0.0
  %276 = vmatprep.subr.mxu0 0.0
  %277 = vmatpush1.msra.mxu0 0.0
  %278 = vmatprep.subr.mxu0 0.0
  %279 = vmatpush1.msra.mxu0 0.0
  %280 = vmatprep.subr.mxu0 0.0
  %281 = vmatpush1.msra.mxu0 0.0
  %282 = vmatprep.subr.mxu0 0.0
  %283 = vmatpush1.msra.mxu0 0.0
  %284 = vmatprep.subr.mxu0 0.0
  %285 = vmatpush1.msra.mxu0 0.0
  %286 = vmatprep.subr.mxu0 0.0
  %287 = vmatpush1.msra.mxu0 0.0
  %288 = vmatprep.subr.mxu0 0.0
  %289 = vmatpush1.msra.mxu0 0.0
  %290 = vmatprep.subr.mxu0 0.0
  %291 = vmatpush1.msra.mxu0 0.0
  %292 = vmatprep.subr.mxu0 0.0
  %293 = vmatpush1.msra.mxu0 0.0
  %294 = vmatprep.subr.mxu0 0.0
  %295 = vmatpush1.msra.mxu0 0.0
  %296 = vmatprep.subr.mxu0 0.0
  %297 = vmatpush1.msra.mxu0 0.0
  %298 = vmatprep.subr.mxu0 0.0
  %299 = vmatpush1.msra.mxu0 0.0
  %300 = vmatprep.subr.mxu0 0.0
  %301 = vmatpush1.msra.mxu0 0.0
  %302 = vmatprep.subr.mxu0 0.0
  %303 = vmatpush1.msra.mxu0 0.0
  %304 = vmatprep.subr.mxu0 0.0
  %305 = vmatpush1.msra.mxu0 0.0
  %306 = vmatprep.subr.mxu0 0.0
  %307 = vmatpush1.msra.mxu0 0.0
  %308 = vmatprep.subr.mxu0 0.0
  %309 = vmatpush1.msra.mxu0 0.0
  %310 = vmatprep.subr.mxu0 0.0
  %311 = vmatpush1.msra.mxu0 0.0
  %312 = vmatprep.subr.mxu0 0.0
  %313 = vmatpush1.msra.mxu0 0.0
  %314 = vmatprep.subr.mxu0 0.0
  %315 = vmatpush1.msra.mxu0 0.0
  %316 = vmatprep.subr.mxu0 0.0
  %317 = vmatpush1.msra.mxu0 0.0
  %318 = vmatprep.subr.mxu0 0.0
  %319 = vmatpush1.msra.mxu0 0.0
  %320 = vmatprep.subr.mxu0 0.0
  %321 = vmatpush1.msra.mxu0 0.0
  %322 = vmatprep.mubr.f32.mxu0 0.0
  %323 = vmatmul.mubr.f32.gmra.mrb[0].mxu0 %v246
  %v324 = vpop.f32.mrb[0].mxu0
  %v325 = vadd.f32 %v237, %v324
  %v326 = vpop.f32.mrb[0].mxu0
  %v327 = vadd.f32 %v237, %v326
  %328 = vmatprep.mubr.f32.mxu0 0.0
  %329 = vmatmul.mubr.f32.gmra.mrb[0].mxu0 %v249
  %v330 = vpop.f32.mrb[0].mxu0
  %v331 = vadd.f32 %v242, %v330
  %v332 = vpop.f32.mrb[0].mxu0
  %v333 = vadd.f32 %v242, %v332
  %334 = vdwg.mxu0
  %v335 = vmul.f32 %v331, 0.5
  %v336 = vmul.f32 %v333, 0.5
  %v337 = vmul.f32 %v335, 1.442695
  %v338 = vpow.pop %v337
  %v339 = vmul.f32 %v336, 1.442695
  %v340 = vpow.pop %v339
  %v341 = vmul.f32 %v36, %v338
  %v342 = vmul.f32 %v37, %v340
  %v343 = vadd.f32 %v325, %v341
  %v344 = vadd.f32 %v327, %v342
  %v345 = vld [vmem:[%s5] sm:$0xff]
  %v346 = vld [vmem:[%s5 + $0x8] sm:$0xff]
  %v347 = vld [vmem:[%s5 + $0x10] sm:$0xff]
  %v348 = vld [vmem:[%s5 + $0x18] sm:$0xff]
  %v349 = vld [vmem:[%s5 + $0x20] sm:$0xff]
  %v350 = vld [vmem:[%s5 + $0x28] sm:$0xff]
  %v351 = vld [vmem:[%s5 + $0x30] sm:$0x3]
  %v352 = vld [vmem:[%s6] sm:$0xff]
  %v353 = vld [vmem:[%s6 + $0x8] sm:$0xff]
  %v354 = vld [vmem:[%s6 + $0x10] sm:$0xff]
  %v355 = vld [vmem:[%s6 + $0x18] sm:$0xff]
  %v356 = vld [vmem:[%s6 + $0x20] sm:$0xff]
  %v357 = vld [vmem:[%s6 + $0x28] sm:$0xff]
  %v358 = vld [vmem:[%s6 + $0x30] sm:$0x3]
  %360 = vset.pattern.permute.xlu0 0
  %361 = vperm.xlu0 %360, %v352
  %v362 = vpop.permute.xlu0 %361
  %365 = vset.pattern.permute.xlu0 0
  %366 = vperm.xlu0 %365, %v353
  %v367 = vpop.permute.xlu0 %366
  %370 = vset.pattern.permute.xlu0 0
  %371 = vperm.xlu0 %370, %v354
  %v372 = vpop.permute.xlu0 %371
  %375 = vset.pattern.permute.xlu0 0
  %376 = vperm.xlu0 %375, %v355
  %v377 = vpop.permute.xlu0 %376
  %380 = vset.pattern.permute.xlu0 0
  %381 = vperm.xlu0 %380, %v356
  %v382 = vpop.permute.xlu0 %381
  %385 = vset.pattern.permute.xlu0 0
  %386 = vperm.xlu0 %385, %v357
  %v387 = vpop.permute.xlu0 %386
  %390 = vset.pattern.permute.xlu0 0
  %391 = vperm.xlu0 %390, %v358
  %v392 = vpop.permute.xlu0 %391
  %vm394 = vcmask 64512
  %v396 = vsel %vm394, %v345, 0
  %v399 = vsel %vm394, %v346, 0
  %v402 = vsel %vm394, %v347, 0
  %v405 = vsel %vm394, %v348, 0
  %v408 = vsel %vm394, %v349, 0
  %v411 = vsel %vm394, %v350, 0
  %v414 = vsel %vm394, %v351, 0
  %416 = vmatprep.subr.mxu0 %v344
  %417 = vmatpush1.msra.mxu0 %v343
  %418 = vmatprep.subr.mxu0 0.0
  %419 = vmatpush1.msra.mxu0 0.0
  %420 = vmatprep.subr.mxu0 0.0
  %421 = vmatpush1.msra.mxu0 0.0
  %422 = vmatprep.subr.mxu0 0.0
  %423 = vmatpush1.msra.mxu0 0.0
  %424 = vmatprep.subr.mxu0 0.0
  %425 = vmatpush1.msra.mxu0 0.0
  %426 = vmatprep.subr.mxu0 0.0
  %427 = vmatpush1.msra.mxu0 0.0
  %428 = vmatprep.subr.mxu0 0.0
  %429 = vmatpush1.msra.mxu0 0.0
  %430 = vmatprep.subr.mxu0 0.0
  %431 = vmatpush1.msra.mxu0 0.0
  %432 = vmatprep.subr.mxu0 0.0
  %433 = vmatpush1.msra.mxu0 0.0
  %434 = vmatprep.subr.mxu0 0.0
  %435 = vmatpush1.msra.mxu0 0.0
  %436 = vmatprep.subr.mxu0 0.0
  %437 = vmatpush1.msra.mxu0 0.0
  %438 = vmatprep.subr.mxu0 0.0
  %439 = vmatpush1.msra.mxu0 0.0
  %440 = vmatprep.subr.mxu0 0.0
  %441 = vmatpush1.msra.mxu0 0.0
  %442 = vmatprep.subr.mxu0 0.0
  %443 = vmatpush1.msra.mxu0 0.0
  %444 = vmatprep.subr.mxu0 0.0
  %445 = vmatpush1.msra.mxu0 0.0
  %446 = vmatprep.subr.mxu0 0.0
  %447 = vmatpush1.msra.mxu0 0.0
  %448 = vmatprep.subr.mxu0 0.0
  %449 = vmatpush1.msra.mxu0 0.0
  %450 = vmatprep.subr.mxu0 0.0
  %451 = vmatpush1.msra.mxu0 0.0
  %452 = vmatprep.subr.mxu0 0.0
  %453 = vmatpush1.msra.mxu0 0.0
  %454 = vmatprep.subr.mxu0 0.0
  %455 = vmatpush1.msra.mxu0 0.0
  %456 = vmatprep.subr.mxu0 0.0
  %457 = vmatpush1.msra.mxu0 0.0
  %458 = vmatprep.subr.mxu0 0.0
  %459 = vmatpush1.msra.mxu0 0.0
  %460 = vmatprep.subr.mxu0 0.0
  %461 = vmatpush1.msra.mxu0 0.0
  %462 = vmatprep.subr.mxu0 0.0
  %463 = vmatpush1.msra.mxu0 0.0
  %464 = vmatprep.subr.mxu0 0.0
  %465 = vmatpush1.msra.mxu0 0.0
  %466 = vmatprep.subr.mxu0 0.0
  %467 = vmatpush1.msra.mxu0 0.0
  %468 = vmatprep.subr.mxu0 0.0
  %469 = vmatpush1.msra.mxu0 0.0
  %470 = vmatprep.subr.mxu0 0.0
  %471 = vmatpush1.msra.mxu0 0.0
  %472 = vmatprep.subr.mxu0 0.0
  %473 = vmatpush1.msra.mxu0 0.0
  %474 = vmatprep.subr.mxu0 0.0
  %475 = vmatpush1.msra.mxu0 0.0
  %476 = vmatprep.subr.mxu0 0.0
  %477 = vmatpush1.msra.mxu0 0.0
  %478 = vmatprep.subr.mxu0 0.0
  %479 = vmatpush1.msra.mxu0 0.0
  %480 = vmatprep.mubr.f32.mxu0 0.0
  %481 = vmatmul.mubr.f32.gmra.mrb[0].mxu0 %v396
  %v482 = vpop.f32.mrb[0].mxu0
  %v483 = vadd.f32 %v362, %v482
  %v484 = vpop.f32.mrb[0].mxu0
  %v485 = vadd.f32 %v362, %v484
  %486 = vmatprep.mubr.f32.mxu0 0.0
  %487 = vmatmul.mubr.f32.gmra.mrb[0].mxu0 %v399
  %v488 = vpop.f32.mrb[0].mxu0
  %v489 = vadd.f32 %v367, %v488
  %v490 = vpop.f32.mrb[0].mxu0
  %v491 = vadd.f32 %v367, %v490
  %492 = vmatprep.mubr.f32.mxu0 0.0
  %493 = vmatmul.mubr.f32.gmra.mrb[0].mxu0 %v402
  %v494 = vpop.f32.mrb[0].mxu0
  %v495 = vadd.f32 %v372, %v494
  %v496 = vpop.f32.mrb[0].mxu0
  %v497 = vadd.f32 %v372, %v496
  %498 = vmatprep.mubr.f32.mxu0 0.0
  %499 = vmatmul.mubr.f32.gmra.mrb[0].mxu0 %v405
  %v500 = vpop.f32.mrb[0].mxu0
  %v501 = vadd.f32 %v377, %v500
  %v502 = vpop.f32.mrb[0].mxu0
  %v503 = vadd.f32 %v377, %v502
  %504 = vmatprep.mubr.f32.mxu0 0.0
  %505 = vmatmul.mubr.f32.gmra.mrb[0].mxu0 %v408
  %v506 = vpop.f32.mrb[0].mxu0
  %v507 = vadd.f32 %v382, %v506
  %v508 = vpop.f32.mrb[0].mxu0
  %v509 = vadd.f32 %v382, %v508
  %510 = vmatprep.mubr.f32.mxu0 0.0
  %511 = vmatmul.mubr.f32.gmra.mrb[0].mxu0 %v411
  %v512 = vpop.f32.mrb[0].mxu0
  %v513 = vadd.f32 %v387, %v512
  %v514 = vpop.f32.mrb[0].mxu0
  %v515 = vadd.f32 %v387, %v514
  %516 = vmatprep.mubr.f32.mxu0 0.0
  %517 = vmatmul.mubr.f32.gmra.mrb[0].mxu0 %v414
  %v518 = vpop.f32.mrb[0].mxu0
  %v519 = vadd.f32 %v392, %v518
  %v520 = vpop.f32.mrb[0].mxu0
  %v521 = vadd.f32 %v392, %v520
  %522 = vdwg.mxu0
  %v523 = vmax.f32 %v483, 0.0
  %v524 = vmax.f32 %v485, 0.0
  %v525 = vmax.f32 %v489, 0.0
  %v526 = vmax.f32 %v491, 0.0
  %v527 = vmax.f32 %v495, 0.0
  %v528 = vmax.f32 %v497, 0.0
  %v529 = vmax.f32 %v501, 0.0
  %v530 = vmax.f32 %v503, 0.0
  %v531 = vmax.f32 %v507, 0.0
  %v532 = vmax.f32 %v509, 0.0
  %v533 = vmax.f32 %v513, 0.0
  %v534 = vmax.f32 %v515, 0.0
  %v535 = vmax.f32 %v519, 0.0
  %v536 = vmax.f32 %v521, 0.0
  %v537 = vld [vmem:[%s7] sm:$0xff]
  %v538 = vld [vmem:[%s7 + $0x8] sm:$0xff]
  %v539 = vld [vmem:[%s8] sm:$0xff]
  %v540 = vld [vmem:[%s8 + $0x8] sm:$0xff]
  %542 = vset.pattern.permute.xlu0 0
  %543 = vperm.xlu0 %542, %v539
  %v544 = vpop.permute.xlu0 %543
  %547 = vset.pattern.permute.xlu0 0
  %548 = vperm.xlu0 %547, %v540
  %v549 = vpop.permute.xlu0 %548
  %v552 = vsel %vm244, %v537, 0
  %v555 = vsel %vm244, %v538, 0
  %v558 = vsel %vm251, %v535, 0
  %v561 = vsel %vm251, %v536, 0
  %563 = vmatprep.subr.mxu0 %v524
  %564 = vmatpush1.msra.mxu0 %v523
  %565 = vmatprep.subr.mxu0 %v526
  %566 = vmatpush1.msra.mxu0 %v525
  %567 = vmatprep.subr.mxu0 %v528
  %568 = vmatpush1.msra.mxu0 %v527
  %569 = vmatprep.subr.mxu0 %v530
  %570 = vmatpush1.msra.mxu0 %v529
  %571 = vmatprep.subr.mxu0 %v532
  %572 = vmatpush1.msra.mxu0 %v531
  %573 = vmatprep.subr.mxu0 %v534
  %574 = vmatpush1.msra.mxu0 %v533
  %575 = vmatprep.subr.mxu0 %v561
  %576 = vmatpush1.msra.mxu0 %v558
  %577 = vmatprep.subr.mxu0 0.0
  %578 = vmatpush1.msra.mxu0 0.0
  %579 = vmatprep.subr.mxu0 0.0
  %580 = vmatpush1.msra.mxu0 0.0
  %581 = vmatprep.subr.mxu0 0.0
  %582 = vmatpush1.msra.mxu0 0.0
  %583 = vmatprep.subr.mxu0 0.0
  %584 = vmatpush1.msra.mxu0 0.0
  %585 = vmatprep.subr.mxu0 0.0
  %586 = vmatpush1.msra.mxu0 0.0
  %587 = vmatprep.subr.mxu0 0.0
  %588 = vmatpush1.msra.mxu0 0.0
  %589 = vmatprep.subr.mxu0 0.0
  %590 = vmatpush1.msra.mxu0 0.0
  %591 = vmatprep.subr.mxu0 0.0
  %592 = vmatpush1.msra.mxu0 0.0
  %593 = vmatprep.subr.mxu0 0.0
  %594 = vmatpush1.msra.mxu0 0.0
  %595 = vmatprep.subr.mxu0 0.0
  %596 = vmatpush1.msra.mxu0 0.0
  %597 = vmatprep.subr.mxu0 0.0
  %598 = vmatpush1.msra.mxu0 0.0
  %599 = vmatprep.subr.mxu0 0.0
  %600 = vmatpush1.msra.mxu0 0.0
  %601 = vmatprep.subr.mxu0 0.0
  %602 = vmatpush1.msra.mxu0 0.0
  %603 = vmatprep.subr.mxu0 0.0
  %604 = vmatpush1.msra.mxu0 0.0
  %605 = vmatprep.subr.mxu0 0.0
  %606 = vmatpush1.msra.mxu0 0.0
  %607 = vmatprep.subr.mxu0 0.0
  %608 = vmatpush1.msra.mxu0 0.0
  %609 = vmatprep.subr.mxu0 0.0
  %610 = vmatpush1.msra.mxu0 0.0
  %611 = vmatprep.subr.mxu0 0.0
  %612 = vmatpush1.msra.mxu0 0.0
  %613 = vmatprep.subr.mxu0 0.0
  %614 = vmatpush1.msra.mxu0 0.0
  %615 = vmatprep.subr.mxu0 0.0
  %616 = vmatpush1.msra.mxu0 0.0
  %617 = vmatprep.subr.mxu0 0.0
  %618 = vmatpush1.msra.mxu0 0.0
  %619 = vmatprep.subr.mxu0 0.0
  %620 = vmatpush1.msra.mxu0 0.0
  %621 = vmatprep.subr.mxu0 0.0
  %622 = vmatpush1.msra.mxu0 0.0
  %623 = vmatprep.subr.mxu0 0.0
  %624 = vmatpush1.msra.mxu0 0.0
  %625 = vmatprep.subr.mxu0 0.0
  %626 = vmatpush1.msra.mxu0 0.0
  %627 = vmatprep.mubr.f32.mxu0 0.0
  %628 = vmatmul.mubr.f32.gmra.mrb[0].mxu0 %v552
  %v629 = vpop.f32.mrb[0].mxu0
  %v630 = vadd.f32 %v544, %v629
  %v631 = vpop.f32.mrb[0].mxu0
  %v632 = vadd.f32 %v544, %v631
  %633 = vmatprep.mubr.f32.mxu0 0.0
  %634 = vmatmul.mubr.f32.gmra.mrb[0].mxu0 %v555
  %v635 = vpop.f32.mrb[0].mxu0
  %v636 = vadd.f32 %v549, %v635
  %v637 = vpop.f32.mrb[0].mxu0
  %v638 = vadd.f32 %v549, %v637
  %639 = vdwg.mxu0
  %640 = vst [vmem:[%s9] sm:$0xff] %v630
  %641 = vst [vmem:[%s9 + $0x8] sm:$0xff] %v632
  %642 = vst [vmem:[%s9 + $0x10] sm:$0xff] %v636
  %643 = vst [vmem:[%s9 + $0x18] sm:$0xff] %v638
  %644 = vst [vmem:[%s9 + $0x20] sm:$0xff] %v325
  %645 = vst [vmem:[%s9 + $0x28] sm:$0xff] %v327
  %646 = vst [vmem:[%s9 + $0x30] sm:$0xff] %v331
  %647 = vst [vmem:[%s9 + $0x38] sm:$0xff] %v333
  // Predicated region
  $region38: #{vae_forward.1} parent=0 // pred_check
    _
  $region39: #{vae_forward.1} parent=0 // pred_check_branch
    %649 = sbr.rel (0) target = $region41
  $region40: #{vae_forward.1} parent=0 // pred_region
    _
  $region41: #{vae_forward.1} parent=0 // pred_fallthru
    _
  // Predicated region
  $region42: #{vae_forward.1} parent=0 // pred_check
    _
  $region43: #{vae_forward.1} parent=0 // pred_check_branch
    %651 = sbr.rel (0) target = $region45
  $region44: #{vae_forward.1} parent=0 // pred_region
    _
  $region45: #{vae_forward.1} parent=0 // pred_fallthru
    _

</llo_original>
